<compile_context>
chip_gen: v7x
topology: tpu7x:2x2x1
jax: 0.10.0
libtpu: 0.0.40
codegen_flags: <defaults>
</compile_context>

<pallas_src>
import functools

import jax
import jax.numpy as jnp
from jax.experimental import pallas as pl
from jax.experimental.pallas import tpu as pltpu


def _resnet_mlp_eval_kernel(x_ref, w1_ref, b1_ref, w2_ref, b2_ref, w3_ref,
                            b3_ref, o_ref):
    # Cast x to bf16 in-kernel (hides under the x-tile DMA); weights arrive
    # pre-cast to bf16.  Accumulate in f32; bias/residual/relu epilogue in f32
    # (v5e VPU has no bf16).
    x = x_ref[...].astype(jnp.bfloat16)                 # (blk, D_in) bf16

    # fc1 -> dropout (identity, eval) -> relu
    h = jnp.dot(x, w1_ref[...], preferred_element_type=jnp.float32)
    h = jnp.maximum(h + b1_ref[...], 0.0)               # f32 (blk, H)

    # fc2 -> residual add -> dropout (identity) -> relu
    h2 = jnp.dot(h.astype(jnp.bfloat16), w2_ref[...],
                 preferred_element_type=jnp.float32)
    h2 = jnp.maximum(h2 + b2_ref[...] + h, 0.0)         # f32 (blk, H)

    # fc3: write the output directly in its final dtype / final (unpadded) shape.
    out = jnp.dot(h2.astype(jnp.bfloat16), w3_ref[...],
                  preferred_element_type=jnp.float32)
    o_ref[...] = (out + b3_ref[...]).astype(o_ref.dtype)


def _round_up(x: int, m: int) -> int:
    return ((x + m - 1) // m) * m


def _tensorcores_per_chip() -> int:
    """Best-effort TensorCores-per-chip: 2 on megacore parts (v4/v5p) and v7x,
    1 on v5e/v6e.  Purely a tiling heuristic — any answer stays correct."""
    try:
        kind = jax.devices()[0].device_kind.lower().replace(" ", "")
    except Exception:  # pragma: no cover - non-TPU / odd backends
        return 1
    if any(tag in kind for tag in ("v7", "tpu7", "v4", "v5p")):
        return 2
    return 1


def _default_block_b(B: int, num_cores: int) -> int:
    """Batch row tile.

    Single-TC chips (v5e/v6e): one big tile -> fewest grid steps (~0.35us/step
    saved), blk == B when B <= 512 so the block equals the full dim.
    2-TC chips (v7x): an EVEN number of grid steps >= 2 so the 'parallel' axis
    shards evenly over both TensorCores; tiles capped at 512 rows."""
    max_rows = 512
    if num_cores <= 1 or B < 16:
        if B <= max_rows:
            return B                                    # single grid step
        steps = pl.cdiv(B, max_rows)
        return _round_up(pl.cdiv(B, steps), 8)
    steps = max(2, 2 * pl.cdiv(pl.cdiv(B, max_rows), 2))  # even, >= 2
    return _round_up(pl.cdiv(B, steps), 8)


def prepare_params(w1, b1, w2, b2, w3, b3):
    """One-time parameter conversion (call at model init, NOT per forward):
    weights -> bf16 MXU operands, biases -> f32 for the f32 epilogue."""
    bf16, f32 = jnp.bfloat16, jnp.float32
    return (w1.astype(bf16), b1.astype(f32),
            w2.astype(bf16), b2.astype(f32),
            w3.astype(bf16), b3.astype(f32))


@functools.partial(jax.jit, static_argnames=("block_b",))
def resnet_mlp_forward(x, w1, b1, w2, b2, w3, b3, *, block_b=None):
    """Fused eval-mode resNetMLP forward.

    x: (B, D_in) f32/bf16.  wN: (in, out) pre-transposed bf16 (see
    prepare_params).  bN: (1, out) f32.  Dropout is identity (eval mode).
    """
    B, D_in = x.shape
    H = w1.shape[1]
    D_out = w3.shape[1]

    # --- batch tile selection (sublane-aligned or == full dim) -------------
    if block_b is None:
        blk = _default_block_b(B, _tensorcores_per_chip())
    else:
        blk = int(block_b)
        if blk >= B:
            blk = B
        elif blk % 8 != 0:
            blk = _round_up(blk, 8)                     # enforce (8, *) rule
            if blk >= B:
                blk = B
    grid = (pl.cdiv(B, blk),)

    # --- VMEM budget: double-buffered constants + I/O tiles + intermediates,
    # with 2x headroom.  Ceiling 48 MiB (< v7x's 64 MiB physical per-TC VMEM).
    bf16_b, f32_b = 2, 4
    x_b = jnp.dtype(x.dtype).itemsize
    weights_vmem = 2 * ((D_in * H + H * H + H * D_out) * bf16_b
                        + (2 * H + D_out) * f32_b)
    io_vmem = 2 * (blk * D_in * x_b + blk * D_out * x_b)
    interm_vmem = 4 * blk * H * f32_b
    est = weights_vmem + io_vmem + interm_vmem
    vmem_limit_bytes = int(min(max(2 * est, 8 * 1024 * 1024), 48 * 1024 * 1024))

    # --- honest cost hint so XLA can overlap surrounding ops ----------------
    flops = 2 * B * (D_in * H + H * H + H * D_out)
    bytes_accessed = (B * D_in * x_b                                  # x in
                      + (D_in * H + H * H + H * D_out) * bf16_b       # weights
                      + (2 * H + D_out) * f32_b                       # biases
                      + B * D_out * x_b)                              # out
    cost = pl.CostEstimate(flops=flops, transcendentals=0,
                           bytes_accessed=bytes_accessed)

    return pl.pallas_call(
        _resnet_mlp_eval_kernel,
        out_shape=jax.ShapeDtypeStruct((B, D_out), x.dtype),
        grid_spec=pltpu.PrefetchScalarGridSpec(
            num_scalar_prefetch=0,
            grid=grid,
            in_specs=[
                pl.BlockSpec((blk, D_in), lambda i: (i, 0)),   # x tile (orig dtype)
                pl.BlockSpec((D_in, H), lambda i: (0, 0)),     # w1 bf16
                pl.BlockSpec((1, H), lambda i: (0, 0)),        # b1 f32
                pl.BlockSpec((H, H), lambda i: (0, 0)),        # w2 bf16
                pl.BlockSpec((1, H), lambda i: (0, 0)),        # b2 f32
                pl.BlockSpec((H, D_out), lambda i: (0, 0)),    # w3 bf16
                pl.BlockSpec((1, D_out), lambda i: (0, 0)),    # b3 f32
            ],
            out_specs=pl.BlockSpec((blk, D_out), lambda i: (i, 0)),
        ),
        compiler_params=pltpu.CompilerParams(
            dimension_semantics=("parallel",),
            vmem_limit_bytes=vmem_limit_bytes),
        cost_estimate=cost,
    )(x, w1, b1, w2, b2, w3, b3)


def init_linear_params(key, in_features, out_features, dtype=jnp.float32):
    """Deterministic init matching nn.Linear's U(-1/sqrt(in), 1/sqrt(in)).
    Returns W pre-transposed to (in_features, out_features) and b as (1, out)."""
    k_w, k_b = jax.random.split(key)
    bound = 1.0 / jnp.sqrt(jnp.float32(in_features))
    w = jax.random.uniform(k_w, (in_features, out_features), dtype,
                           minval=-bound, maxval=bound)
    b = jax.random.uniform(k_b, (1, out_features), dtype,
                           minval=-bound, maxval=bound)
    return w, b


def reference_forward(x, w1, b1, w2, b2, w3, b3):
    """Pure-JAX reference mirroring the kernel's mixed precision exactly:
    bf16 MXU operands, f32 accumulation, f32 epilogue, eval-mode dropout."""
    f32, bf16 = jnp.float32, jnp.bfloat16
    h = jnp.dot(x.astype(bf16), w1.astype(bf16), preferred_element_type=f32)
    h = jnp.maximum(h + b1, 0.0)
    h2 = jnp.dot(h.astype(bf16), w2.astype(bf16), preferred_element_type=f32)
    h2 = jnp.maximum(h2 + b2 + h, 0.0)
    out = jnp.dot(h2.astype(bf16), w3.astype(bf16), preferred_element_type=f32)
    return (out + b3).astype(x.dtype)


if __name__ == "__main__":
    # Small shapes consistent with the module: input_size=32,
    # hidden_size=128 (module default), output_size=16, batch=64.
    B, D_IN, HIDDEN, D_OUT = 64, 32, 128, 16

    root = jax.random.PRNGKey(0)
    kx, k1, k2, k3 = jax.random.split(root, 4)

    x = jax.random.normal(kx, (B, D_IN), jnp.float32)
    w1, b1 = init_linear_params(k1, D_IN, HIDDEN)
    w2, b2 = init_linear_params(k2, HIDDEN, HIDDEN)
    w3, b3 = init_linear_params(k3, HIDDEN, D_OUT)

    # One-time parameter prep (bf16 weights / f32 biases) outside the jitted
    # forward, so no cast ops run on the per-call path.
    params = prepare_params(w1, b1, w2, b2, w3, b3)

    out = resnet_mlp_forward(x, *params)
    out = jax.block_until_ready(out)

    ref = reference_forward(x, w1, b1, w2, b2, w3, b3)
    assert out.shape == (B, D_OUT), out.shape
    assert out.dtype == x.dtype, out.dtype
    assert jnp.allclose(out, ref, atol=1e-2, rtol=1e-2), "mismatch vs reference"

    print("KERNEL_OK")
</pallas_src>

<mosaic_0001>
module attributes {stable_mosaic.version = 11 : i64} {
  func.func @_resnet_mlp_eval_kernel(%arg0: i32, %arg1: memref<64x32xf32, #tpu.memory_space<vmem>>, %arg2: memref<32x128xbf16, #tpu.memory_space<vmem>>, %arg3: memref<1x128xf32, #tpu.memory_space<vmem>>, %arg4: memref<128x128xbf16, #tpu.memory_space<vmem>>, %arg5: memref<1x128xf32, #tpu.memory_space<vmem>>, %arg6: memref<128x16xbf16, #tpu.memory_space<vmem>>, %arg7: memref<1x16xf32, #tpu.memory_space<vmem>>, %arg8: memref<64x16xf32, #tpu.memory_space<vmem>>) attributes {dimension_semantics = [#tpu.dimension_semantics<parallel>], iteration_bounds = array<i64: 1>, scalar_prefetch = 0 : i64, scratch_operands = 0 : i64, tpu.core_type = #tpu.core_type<tc>, window_params = [{transform_indices = @transform_0, window_bounds = array<i64: 64, 32>}, {pipeline_mode = #tpu.pipeline_mode<synchronous>, transform_indices = @transform_1, window_bounds = array<i64: 32, 128>}, {pipeline_mode = #tpu.pipeline_mode<synchronous>, transform_indices = @transform_2, window_bounds = array<i64: 1, 128>}, {pipeline_mode = #tpu.pipeline_mode<synchronous>, transform_indices = @transform_3, window_bounds = array<i64: 128, 128>}, {pipeline_mode = #tpu.pipeline_mode<synchronous>, transform_indices = @transform_4, window_bounds = array<i64: 1, 128>}, {pipeline_mode = #tpu.pipeline_mode<synchronous>, transform_indices = @transform_5, window_bounds = array<i64: 128, 16>}, {pipeline_mode = #tpu.pipeline_mode<synchronous>, transform_indices = @transform_6, window_bounds = array<i64: 1, 16>}, {transform_indices = @transform_7, window_bounds = array<i64: 64, 16>}]} {
    %c0 = arith.constant 0 : index
    %c0_0 = arith.constant 0 : index
    %0 = vector.load %arg1[%c0, %c0_0] : memref<64x32xf32, #tpu.memory_space<vmem>>, vector<64x32xf32>
    %1 = arith.truncf %0 : vector<64x32xf32> to vector<64x32xbf16>
    %c0_1 = arith.constant 0 : index
    %c0_2 = arith.constant 0 : index
    %2 = vector.load %arg2[%c0_1, %c0_2] : memref<32x128xbf16, #tpu.memory_space<vmem>>, vector<32x128xbf16>
    %cst = arith.constant dense<0.000000e+00> : vector<64x128xf32>
    %3 = tpu.matmul %1, %2, %cst {dimension_numbers = #tpu.dot_dimension_numbers<[1], [0], [0], [1], [0, 0, 1, 1], [], []>} : vector<64x32xbf16>, vector<32x128xbf16>, vector<64x128xf32> -> vector<64x128xf32>
    %c0_3 = arith.constant 0 : index
    %c0_4 = arith.constant 0 : index
    %4 = vector.load %arg3[%c0_3, %c0_4] : memref<1x128xf32, #tpu.memory_space<vmem>>, vector<1x128xf32>
    %5 = vector.broadcast %4 : vector<1x128xf32> to vector<64x128xf32>
    %6 = arith.addf %3, %5 : vector<64x128xf32>
    %cst_5 = arith.constant 0.000000e+00 : f32
    %7 = vector.broadcast %cst_5 : f32 to vector<64x128xf32>
    %8 = arith.maximumf %6, %7 : vector<64x128xf32>
    %9 = arith.truncf %8 : vector<64x128xf32> to vector<64x128xbf16>
    %c0_6 = arith.constant 0 : index
    %c0_7 = arith.constant 0 : index
    %10 = vector.load %arg4[%c0_6, %c0_7] : memref<128x128xbf16, #tpu.memory_space<vmem>>, vector<128x128xbf16>
    %cst_8 = arith.constant dense<0.000000e+00> : vector<64x128xf32>
    %11 = tpu.matmul %9, %10, %cst_8 {dimension_numbers = #tpu.dot_dimension_numbers<[1], [0], [0], [1], [0, 0, 1, 1], [], []>} : vector<64x128xbf16>, vector<128x128xbf16>, vector<64x128xf32> -> vector<64x128xf32>
    %c0_9 = arith.constant 0 : index
    %c0_10 = arith.constant 0 : index
    %12 = vector.load %arg5[%c0_9, %c0_10] : memref<1x128xf32, #tpu.memory_space<vmem>>, vector<1x128xf32>
    %13 = vector.broadcast %12 : vector<1x128xf32> to vector<64x128xf32>
    %14 = arith.addf %11, %13 : vector<64x128xf32>
    %15 = arith.addf %14, %8 : vector<64x128xf32>
    %cst_11 = arith.constant 0.000000e+00 : f32
    %16 = vector.broadcast %cst_11 : f32 to vector<64x128xf32>
    %17 = arith.maximumf %15, %16 : vector<64x128xf32>
    %18 = arith.truncf %17 : vector<64x128xf32> to vector<64x128xbf16>
    %c0_12 = arith.constant 0 : index
    %c0_13 = arith.constant 0 : index
    %19 = vector.load %arg6[%c0_12, %c0_13] : memref<128x16xbf16, #tpu.memory_space<vmem>>, vector<128x16xbf16>
    %cst_14 = arith.constant dense<0.000000e+00> : vector<64x16xf32>
    %20 = tpu.matmul %18, %19, %cst_14 {dimension_numbers = #tpu.dot_dimension_numbers<[1], [0], [0], [1], [0, 0, 1, 1], [], []>} : vector<64x128xbf16>, vector<128x16xbf16>, vector<64x16xf32> -> vector<64x16xf32>
    %c0_15 = arith.constant 0 : index
    %c0_16 = arith.constant 0 : index
    %21 = vector.load %arg7[%c0_15, %c0_16] : memref<1x16xf32, #tpu.memory_space<vmem>>, vector<1x16xf32>
    %22 = vector.broadcast %21 : vector<1x16xf32> to vector<64x16xf32>
    %23 = arith.addf %20, %22 : vector<64x16xf32>
    %c0_17 = arith.constant 0 : index
    %c0_18 = arith.constant 0 : index
    %24 = vector.load %arg8[%c0_17, %c0_18] : memref<64x16xf32, #tpu.memory_space<vmem>>, vector<64x16xf32>
    tpu.vector_store %arg8[%c0_17, %c0_18], %23 {strides = array<i32>} : memref<64x16xf32, #tpu.memory_space<vmem>>, vector<64x16xf32>,
    return
  }
  func.func @transform_0(%arg0: i32) -> (i32, i32) {
    %c0_i32 = arith.constant 0 : i32
    %c0_i32_0 = arith.constant 0 : i32
    return %arg0, %c0_i32 : i32, i32
  }
  func.func @transform_1(%arg0: i32) -> (i32, i32) {
    %c0_i32 = arith.constant 0 : i32
    %c0_i32_0 = arith.constant 0 : i32
    %c0_i32_1 = arith.constant 0 : i32
    return %c0_i32, %c0_i32_0 : i32, i32
  }
  func.func @transform_2(%arg0: i32) -> (i32, i32) {
    %c0_i32 = arith.constant 0 : i32
    %c0_i32_0 = arith.constant 0 : i32
    %c0_i32_1 = arith.constant 0 : i32
    return %c0_i32, %c0_i32_0 : i32, i32
  }
  func.func @transform_3(%arg0: i32) -> (i32, i32) {
    %c0_i32 = arith.constant 0 : i32
    %c0_i32_0 = arith.constant 0 : i32
    %c0_i32_1 = arith.constant 0 : i32
    return %c0_i32, %c0_i32_0 : i32, i32
  }
  func.func @transform_4(%arg0: i32) -> (i32, i32) {
    %c0_i32 = arith.constant 0 : i32
    %c0_i32_0 = arith.constant 0 : i32
    %c0_i32_1 = arith.constant 0 : i32
    return %c0_i32, %c0_i32_0 : i32, i32
  }
  func.func @transform_5(%arg0: i32) -> (i32, i32) {
    %c0_i32 = arith.constant 0 : i32
    %c0_i32_0 = arith.constant 0 : i32
    %c0_i32_1 = arith.constant 0 : i32
    return %c0_i32, %c0_i32_0 : i32, i32
  }
  func.func @transform_6(%arg0: i32) -> (i32, i32) {
    %c0_i32 = arith.constant 0 : i32
    %c0_i32_0 = arith.constant 0 : i32
    %c0_i32_1 = arith.constant 0 : i32
    return %c0_i32, %c0_i32_0 : i32, i32
  }
  func.func @transform_7(%arg0: i32) -> (i32, i32) {
    %c0_i32 = arith.constant 0 : i32
    %c0_i32_0 = arith.constant 0 : i32
    return %arg0, %c0_i32 : i32, i32
  }
}

</mosaic_0001>

<llo_original>
// kernel: resnet_mlp_forward.1
$region0: #{resnet_mlp_forward.1}
  #allocation0 [shape = 'u32[]', space=smem, size = 0x4, offset = 0x4, fixed_abs, tag = 'smem constant byte address 0x4 - core index']
  #allocation1 [shape = 'u32[144,128]{1,0:T(1,128)}', space=vmem, size = 0x12000, scoped, tag = 'internal scratch']
  %s0 = inlined_call_operand.vmem [shape: f32[64,32], index: 0, kind: input, shape index: {}]
  %s1 = inlined_call_operand.vmem [shape: bf16[32,128], index: 1, kind: input, shape index: {}]
  %s2 = inlined_call_operand.vmem [shape: f32[1,128], index: 2, kind: input, shape index: {}]
  %s3 = inlined_call_operand.vmem [shape: bf16[128,128], index: 3, kind: input, shape index: {}]
  %s4 = inlined_call_operand.vmem [shape: f32[1,128], index: 4, kind: input, shape index: {}]
  %s5 = inlined_call_operand.vmem [shape: bf16[128,16], index: 5, kind: input, shape index: {}]
  %s6 = inlined_call_operand.vmem [shape: f32[1,16], index: 6, kind: input, shape index: {}]
  %s7 = inlined_call_operand.vmem [shape: f32[64,16], index: 7, kind: output, shape index: {}]
  %s8 = sld [smem:[#allocation0]]
  $region38: #{resnet_mlp_forward.1} parent=0
    _
  %s10 = ssub.s32 1, %s8
  %s11 = scalar_select 0, %s10, %s8
  // Predicated region
  $region2: #{resnet_mlp_forward.1} parent=0 // pred_check
    _
  $region3: #{resnet_mlp_forward.1} parent=0 // pred_check_branch
    %13 = sbr.rel (0) target = $region5
  $region4: #{resnet_mlp_forward.1} parent=0 // pred_region
    _
  $region5: #{resnet_mlp_forward.1} parent=0 // pred_fallthru
    _
  // Predicated region
  $region6: #{resnet_mlp_forward.1} parent=0 // pred_check
    _
  $region7: #{resnet_mlp_forward.1} parent=0 // pred_check_branch
    %15 = sbr.rel (0) target = $region9
  $region8: #{resnet_mlp_forward.1} parent=0 // pred_region
    _
  $region9: #{resnet_mlp_forward.1} parent=0 // pred_fallthru
    _
  // Predicated region
  $region10: #{resnet_mlp_forward.1} parent=0 // pred_check
    _
  $region11: #{resnet_mlp_forward.1} parent=0 // pred_check_branch
    %17 = sbr.rel (0) target = $region13
  $region12: #{resnet_mlp_forward.1} parent=0 // pred_region
    _
  $region13: #{resnet_mlp_forward.1} parent=0 // pred_fallthru
    _
  // Predicated region
  $region14: #{resnet_mlp_forward.1} parent=0 // pred_check
    _
  $region15: #{resnet_mlp_forward.1} parent=0 // pred_check_branch
    %19 = sbr.rel (0) target = $region17
  $region16: #{resnet_mlp_forward.1} parent=0 // pred_region
    _
  $region17: #{resnet_mlp_forward.1} parent=0 // pred_fallthru
    _
  // Predicated region
  $region18: #{resnet_mlp_forward.1} parent=0 // pred_check
    _
  $region19: #{resnet_mlp_forward.1} parent=0 // pred_check_branch
    %21 = sbr.rel (0) target = $region21
  $region20: #{resnet_mlp_forward.1} parent=0 // pred_region
    _
  $region21: #{resnet_mlp_forward.1} parent=0 // pred_fallthru
    _
  // Predicated region
  $region22: #{resnet_mlp_forward.1} parent=0 // pred_check
    _
  $region23: #{resnet_mlp_forward.1} parent=0 // pred_check_branch
    %23 = sbr.rel (0) target = $region25
  $region24: #{resnet_mlp_forward.1} parent=0 // pred_region
    _
  $region25: #{resnet_mlp_forward.1} parent=0 // pred_fallthru
    _
  // Predicated region
  $region26: #{resnet_mlp_forward.1} parent=0 // pred_check
    _
  $region27: #{resnet_mlp_forward.1} parent=0 // pred_check_branch
    %25 = sbr.rel (0) target = $region29
  $region28: #{resnet_mlp_forward.1} parent=0 // pred_region
    _
  $region29: #{resnet_mlp_forward.1} parent=0 // pred_fallthru
    _
  %v27 = vld [vmem:[%s0] sm:$0xff]
  %v28 = vld [vmem:[%s0 + $0x8] sm:$0xff]
  %v29 = vld [vmem:[%s0 + $0x10] sm:$0xff]
  %v30 = vld [vmem:[%s0 + $0x18] sm:$0xff]
  %v31 = vld [vmem:[%s0 + $0x20] sm:$0xff]
  %v32 = vld [vmem:[%s0 + $0x28] sm:$0xff]
  %v33 = vld [vmem:[%s0 + $0x30] sm:$0xff]
  %v34 = vld [vmem:[%s0 + $0x38] sm:$0xff]
  %v35 = vpack.c.bf16 %v28, %v27
  %v36 = vpack.c.bf16 %v30, %v29
  %v37 = vpack.c.bf16 %v32, %v31
  %v38 = vpack.c.bf16 %v34, %v33
  %v39 = vld [vmem:[%s1] sm:$0xf]
  %v40 = vld [vmem:[%s1 + $0x4] sm:$0xf]
  %v41 = vld [vmem:[%s1 + $0x8] sm:$0xf]
  %v42 = vld [vmem:[%s1 + $0xc] sm:$0xf]
  %v43 = vld [vmem:[%s2] sm:$0x1]
  %v45 = vlaneseq
  %v46 = vshrl.u32 %v45, 7
  %v47 = vsub.s32 0, %v46
  %v48 = vrot.slane %v43, %v47
  %v54 = vunpack.c.l.b16 %v39
  %v55 = vunpack.c.l.b16 %v40
  %v56 = vunpack.c.l.b16 %v41
  %v57 = vunpack.c.l.b16 %v42
  %v58 = vpack.c.b16 %v55, %v54
  %v59 = vpack.c.b16 %v57, %v56
  %vm62 = vcmask 261120
  %v64 = vsel %vm62, %v35, 0
  %v67 = vsel %vm62, %v36, 0
  %v70 = vsel %vm62, %v37, 0
  %v73 = vsel %vm62, %v38, 0
  %75 = vmatprep.subr.bf16.mxu0 0
  %76 = vmatpush1.bf16.msra.mxu0 %v58
  %77 = vmatprep.subr.bf16.mxu0 0
  %78 = vmatpush1.bf16.msra.mxu0 %v59
  %79 = vmatprep.subr.bf16.mxu0 0
  %80 = vmatpush1.bf16.msra.mxu0 0
  %81 = vmatprep.subr.bf16.mxu0 0
  %82 = vmatpush1.bf16.msra.mxu0 0
  %83 = vmatprep.subr.bf16.mxu0 0
  %84 = vmatpush1.bf16.msra.mxu0 0
  %85 = vmatprep.subr.bf16.mxu0 0
  %86 = vmatpush1.bf16.msra.mxu0 0
  %87 = vmatprep.subr.bf16.mxu0 0
  %88 = vmatpush1.bf16.msra.mxu0 0
  %89 = vmatprep.subr.bf16.mxu0 0
  %90 = vmatpush1.bf16.msra.mxu0 0
  %91 = vmatprep.subr.bf16.mxu0 0
  %92 = vmatpush1.bf16.msra.mxu0 0
  %93 = vmatprep.subr.bf16.mxu0 0
  %94 = vmatpush1.bf16.msra.mxu0 0
  %95 = vmatprep.subr.bf16.mxu0 0
  %96 = vmatpush1.bf16.msra.mxu0 0
  %97 = vmatprep.subr.bf16.mxu0 0
  %98 = vmatpush1.bf16.msra.mxu0 0
  %99 = vmatprep.subr.bf16.mxu0 0
  %100 = vmatpush1.bf16.msra.mxu0 0
  %101 = vmatprep.subr.bf16.mxu0 0
  %102 = vmatpush1.bf16.msra.mxu0 0
  %103 = vmatprep.subr.bf16.mxu0 0
  %104 = vmatpush1.bf16.msra.mxu0 0
  %105 = vmatprep.subr.bf16.mxu0 0
  %106 = vmatpush1.bf16.msra.mxu0 0
  %107 = vmatprep.mubr.bf16.mxu0 0
  %108 = vmatmul.mubr.bf16.gmra.mrb[0].mxu0 %v64
  %v109 = vpop.f32.mrb[0].mxu0
  %v110 = vadd.f32 %v48, %v109
  %v111 = vpop.f32.mrb[0].mxu0
  %v112 = vpop.f32.mrb[0].mxu0
  %v113 = vadd.f32 %v48, %v112
  %v114 = vpop.f32.mrb[0].mxu0
  %115 = vmatprep.mubr.bf16.mxu0 0
  %116 = vmatmul.mubr.bf16.gmra.mrb[0].mxu0 %v67
  %v117 = vpop.f32.mrb[0].mxu0
  %v118 = vadd.f32 %v48, %v117
  %v119 = vpop.f32.mrb[0].mxu0
  %v120 = vpop.f32.mrb[0].mxu0
  %v121 = vadd.f32 %v48, %v120
  %v122 = vpop.f32.mrb[0].mxu0
  %123 = vmatprep.mubr.bf16.mxu0 0
  %124 = vmatmul.mubr.bf16.gmra.mrb[0].mxu0 %v70
  %v125 = vpop.f32.mrb[0].mxu0
  %v126 = vadd.f32 %v48, %v125
  %v127 = vpop.f32.mrb[0].mxu0
  %v128 = vpop.f32.mrb[0].mxu0
  %v129 = vadd.f32 %v48, %v128
  %v130 = vpop.f32.mrb[0].mxu0
  %131 = vmatprep.mubr.bf16.mxu0 0
  %132 = vmatmul.mubr.bf16.gmra.mrb[0].mxu0 %v73
  %v133 = vpop.f32.mrb[0].mxu0
  %v134 = vadd.f32 %v48, %v133
  %v135 = vpop.f32.mrb[0].mxu0
  %v136 = vpop.f32.mrb[0].mxu0
  %v137 = vadd.f32 %v48, %v136
  %v138 = vpop.f32.mrb[0].mxu0
  %139 = vdwg.mxu0
  %v140 = vmax.f32 %v110, 0.0
  %v141 = vmax.f32 %v113, 0.0
  %v142 = vmax.f32 %v118, 0.0
  %v143 = vmax.f32 %v121, 0.0
  %v144 = vmax.f32 %v126, 0.0
  %v145 = vmax.f32 %v129, 0.0
  %v146 = vmax.f32 %v134, 0.0
  %v147 = vmax.f32 %v137, 0.0
  %v148 = vpack.c.bf16 %v141, %v140
  %v149 = vpack.c.bf16 %v143, %v142
  %v150 = vpack.c.bf16 %v145, %v144
  %v151 = vpack.c.bf16 %v147, %v146
  %v152 = vld [vmem:[%s3] sm:$0xf]
  %v153 = vld [vmem:[%s3 + $0x4] sm:$0xf]
  %v154 = vld [vmem:[%s3 + $0x8] sm:$0xf]
  %v155 = vld [vmem:[%s3 + $0xc] sm:$0xf]
  %v156 = vld [vmem:[%s3 + $0x10] sm:$0xf]
  %v157 = vld [vmem:[%s3 + $0x14] sm:$0xf]
  %v158 = vld [vmem:[%s3 + $0x18] sm:$0xf]
  %v159 = vld [vmem:[%s3 + $0x1c] sm:$0xf]
  %v160 = vld [vmem:[%s3 + $0x20] sm:$0xf]
  %v161 = vld [vmem:[%s3 + $0x24] sm:$0xf]
  %v162 = vld [vmem:[%s3 + $0x28] sm:$0xf]
  %v163 = vld [vmem:[%s3 + $0x2c] sm:$0xf]
  %v164 = vld [vmem:[%s3 + $0x30] sm:$0xf]
  %v165 = vld [vmem:[%s3 + $0x34] sm:$0xf]
  %v166 = vld [vmem:[%s3 + $0x38] sm:$0xf]
  %v167 = vld [vmem:[%s3 + $0x3c] sm:$0xf]
  %v168 = vld [vmem:[%s4] sm:$0x1]
  %v170 = vlaneseq
  %v171 = vshrl.u32 %v170, 7
  %v172 = vsub.s32 0, %v171
  %v173 = vrot.slane %v168, %v172
  %v191 = vunpack.c.l.b16 %v152
  %v192 = vunpack.c.l.b16 %v153
  %v193 = vunpack.c.l.b16 %v154
  %v194 = vunpack.c.l.b16 %v155
  %v195 = vunpack.c.l.b16 %v156
  %v196 = vunpack.c.l.b16 %v157
  %v197 = vunpack.c.l.b16 %v158
  %v198 = vunpack.c.l.b16 %v159
  %v199 = vunpack.c.l.b16 %v160
  %v200 = vunpack.c.l.b16 %v161
  %v201 = vunpack.c.l.b16 %v162
  %v202 = vunpack.c.l.b16 %v163
  %v203 = vunpack.c.l.b16 %v164
  %v204 = vunpack.c.l.b16 %v165
  %v205 = vunpack.c.l.b16 %v166
  %v206 = vunpack.c.l.b16 %v167
  %v207 = vpack.c.b16 %v192, %v191
  %v208 = vpack.c.b16 %v194, %v193
  %v209 = vpack.c.b16 %v196, %v195
  %v210 = vpack.c.b16 %v198, %v197
  %v211 = vpack.c.b16 %v200, %v199
  %v212 = vpack.c.b16 %v202, %v201
  %v213 = vpack.c.b16 %v204, %v203
  %v214 = vpack.c.b16 %v206, %v205
  %223 = vmatprep.subr.bf16.mxu0 0
  %224 = vmatpush1.bf16.msra.mxu0 %v207
  %225 = vmatprep.subr.bf16.mxu0 0
  %226 = vmatpush1.bf16.msra.mxu0 %v208
  %227 = vmatprep.subr.bf16.mxu0 0
  %228 = vmatpush1.bf16.msra.mxu0 %v209
  %229 = vmatprep.subr.bf16.mxu0 0
  %230 = vmatpush1.bf16.msra.mxu0 %v210
  %231 = vmatprep.subr.bf16.mxu0 0
  %232 = vmatpush1.bf16.msra.mxu0 %v211
  %233 = vmatprep.subr.bf16.mxu0 0
  %234 = vmatpush1.bf16.msra.mxu0 %v212
  %235 = vmatprep.subr.bf16.mxu0 0
  %236 = vmatpush1.bf16.msra.mxu0 %v213
  %237 = vmatprep.subr.bf16.mxu0 0
  %238 = vmatpush1.bf16.msra.mxu0 %v214
  %239 = vmatprep.subr.bf16.mxu0 0
  %240 = vmatpush1.bf16.msra.mxu0 0
  %241 = vmatprep.subr.bf16.mxu0 0
  %242 = vmatpush1.bf16.msra.mxu0 0
  %243 = vmatprep.subr.bf16.mxu0 0
  %244 = vmatpush1.bf16.msra.mxu0 0
  %245 = vmatprep.subr.bf16.mxu0 0
  %246 = vmatpush1.bf16.msra.mxu0 0
  %247 = vmatprep.subr.bf16.mxu0 0
  %248 = vmatpush1.bf16.msra.mxu0 0
  %249 = vmatprep.subr.bf16.mxu0 0
  %250 = vmatpush1.bf16.msra.mxu0 0
  %251 = vmatprep.subr.bf16.mxu0 0
  %252 = vmatpush1.bf16.msra.mxu0 0
  %253 = vmatprep.subr.bf16.mxu0 0
  %254 = vmatpush1.bf16.msra.mxu0 0
  %255 = vmatprep.mubr.bf16.mxu0 0
  %256 = vmatmul.mubr.bf16.gmra.mrb[0].mxu0 %v148
  %v257 = vpop.f32.mrb[0].mxu0
  %v258 = vadd.f32 %v173, %v257
  %v259 = vpop.f32.mrb[0].mxu0
  %v260 = vpop.f32.mrb[0].mxu0
  %v261 = vadd.f32 %v173, %v260
  %v262 = vpop.f32.mrb[0].mxu0
  %263 = vmatprep.mubr.bf16.mxu0 0
  %264 = vmatmul.mubr.bf16.gmra.mrb[0].mxu0 %v149
  %v265 = vpop.f32.mrb[0].mxu0
  %v266 = vadd.f32 %v173, %v265
  %v267 = vpop.f32.mrb[0].mxu0
  %v268 = vpop.f32.mrb[0].mxu0
  %v269 = vadd.f32 %v173, %v268
  %v270 = vpop.f32.mrb[0].mxu0
  %271 = vmatprep.mubr.bf16.mxu0 0
  %272 = vmatmul.mubr.bf16.gmra.mrb[0].mxu0 %v150
  %v273 = vpop.f32.mrb[0].mxu0
  %v274 = vadd.f32 %v173, %v273
  %v275 = vpop.f32.mrb[0].mxu0
  %v276 = vpop.f32.mrb[0].mxu0
  %v277 = vadd.f32 %v173, %v276
  %v278 = vpop.f32.mrb[0].mxu0
  %279 = vmatprep.mubr.bf16.mxu0 0
  %280 = vmatmul.mubr.bf16.gmra.mrb[0].mxu0 %v151
  %v281 = vpop.f32.mrb[0].mxu0
  %v282 = vadd.f32 %v173, %v281
  %v283 = vpop.f32.mrb[0].mxu0
  %v284 = vpop.f32.mrb[0].mxu0
  %v285 = vadd.f32 %v173, %v284
  %v286 = vpop.f32.mrb[0].mxu0
  %287 = vdwg.mxu0
  %v288 = vadd.f32 %v258, %v140
  %v289 = vadd.f32 %v261, %v141
  %v290 = vadd.f32 %v266, %v142
  %v291 = vadd.f32 %v269, %v143
  %v292 = vadd.f32 %v274, %v144
  %v293 = vadd.f32 %v277, %v145
  %v294 = vadd.f32 %v282, %v146
  %v295 = vadd.f32 %v285, %v147
  %v296 = vmax.f32 %v288, 0.0
  %v297 = vmax.f32 %v289, 0.0
  %v298 = vmax.f32 %v290, 0.0
  %v299 = vmax.f32 %v291, 0.0
  %v300 = vmax.f32 %v292, 0.0
  %v301 = vmax.f32 %v293, 0.0
  %v302 = vmax.f32 %v294, 0.0
  %v303 = vmax.f32 %v295, 0.0
  %v304 = vpack.c.bf16 %v297, %v296
  %v305 = vpack.c.bf16 %v299, %v298
  %v306 = vpack.c.bf16 %v301, %v300
  %v307 = vpack.c.bf16 %v303, %v302
  %v308 = vld [vmem:[%s5] sm:$0xf]
  %v309 = vld [vmem:[%s5 + $0x4] sm:$0xf]
  %v310 = vld [vmem:[%s5 + $0x8] sm:$0xf]
  %v311 = vld [vmem:[%s5 + $0xc] sm:$0xf]
  %v312 = vld [vmem:[%s5 + $0x10] sm:$0xf]
  %v313 = vld [vmem:[%s5 + $0x14] sm:$0xf]
  %v314 = vld [vmem:[%s5 + $0x18] sm:$0xf]
  %v315 = vld [vmem:[%s5 + $0x1c] sm:$0xf]
  %v316 = vld [vmem:[%s5 + $0x20] sm:$0xf]
  %v317 = vld [vmem:[%s5 + $0x24] sm:$0xf]
  %v318 = vld [vmem:[%s5 + $0x28] sm:$0xf]
  %v319 = vld [vmem:[%s5 + $0x2c] sm:$0xf]
  %v320 = vld [vmem:[%s5 + $0x30] sm:$0xf]
  %v321 = vld [vmem:[%s5 + $0x34] sm:$0xf]
  %v322 = vld [vmem:[%s5 + $0x38] sm:$0xf]
  %v323 = vld [vmem:[%s5 + $0x3c] sm:$0xf]
  %v324 = vld [vmem:[%s6] sm:$0x1]
  %v326 = vlaneseq
  %v327 = vshrl.u32 %v326, 7
  %v328 = vsub.s32 0, %v327
  %v329 = vrot.slane %v324, %v328
  %v347 = vunpack.c.l.b16 %v308
  %v348 = vunpack.c.l.b16 %v309
  %v349 = vunpack.c.l.b16 %v310
  %v350 = vunpack.c.l.b16 %v311
  %v351 = vunpack.c.l.b16 %v312
  %v352 = vunpack.c.l.b16 %v313
  %v353 = vunpack.c.l.b16 %v314
  %v354 = vunpack.c.l.b16 %v315
  %v355 = vunpack.c.l.b16 %v316
  %v356 = vunpack.c.l.b16 %v317
  %v357 = vunpack.c.l.b16 %v318
  %v358 = vunpack.c.l.b16 %v319
  %v359 = vunpack.c.l.b16 %v320
  %v360 = vunpack.c.l.b16 %v321
  %v361 = vunpack.c.l.b16 %v322
  %v362 = vunpack.c.l.b16 %v323
  %v363 = vpack.c.b16 %v348, %v347
  %v364 = vpack.c.b16 %v350, %v349
  %v365 = vpack.c.b16 %v352, %v351
  %v366 = vpack.c.b16 %v354, %v353
  %v367 = vpack.c.b16 %v356, %v355
  %v368 = vpack.c.b16 %v358, %v357
  %v369 = vpack.c.b16 %v360, %v359
  %v370 = vpack.c.b16 %v362, %v361
  %379 = vmatprep.subr.bf16.mxu0 0
  %380 = vmatpush1.bf16.msra.mxu0 %v363
  %381 = vmatprep.subr.bf16.mxu0 0
  %382 = vmatpush1.bf16.msra.mxu0 %v364
  %383 = vmatprep.subr.bf16.mxu0 0
  %384 = vmatpush1.bf16.msra.mxu0 %v365
  %385 = vmatprep.subr.bf16.mxu0 0
  %386 = vmatpush1.bf16.msra.mxu0 %v366
  %387 = vmatprep.subr.bf16.mxu0 0
  %388 = vmatpush1.bf16.msra.mxu0 %v367
  %389 = vmatprep.subr.bf16.mxu0 0
  %390 = vmatpush1.bf16.msra.mxu0 %v368
  %391 = vmatprep.subr.bf16.mxu0 0
  %392 = vmatpush1.bf16.msra.mxu0 %v369
  %393 = vmatprep.subr.bf16.mxu0 0
  %394 = vmatpush1.bf16.msra.mxu0 %v370
  %395 = vmatprep.subr.bf16.mxu0 0
  %396 = vmatpush1.bf16.msra.mxu0 0
  %397 = vmatprep.subr.bf16.mxu0 0
  %398 = vmatpush1.bf16.msra.mxu0 0
  %399 = vmatprep.subr.bf16.mxu0 0
  %400 = vmatpush1.bf16.msra.mxu0 0
  %401 = vmatprep.subr.bf16.mxu0 0
  %402 = vmatpush1.bf16.msra.mxu0 0
  %403 = vmatprep.subr.bf16.mxu0 0
  %404 = vmatpush1.bf16.msra.mxu0 0
  %405 = vmatprep.subr.bf16.mxu0 0
  %406 = vmatpush1.bf16.msra.mxu0 0
  %407 = vmatprep.subr.bf16.mxu0 0
  %408 = vmatpush1.bf16.msra.mxu0 0
  %409 = vmatprep.subr.bf16.mxu0 0
  %410 = vmatpush1.bf16.msra.mxu0 0
  %411 = vmatprep.mubr.bf16.mxu0 0
  %412 = vmatmul.mubr.bf16.gmra.mrb[0].mxu0 %v304
  %v413 = vpop.f32.mrb[0].mxu0
  %v414 = vadd.f32 %v329, %v413
  %v415 = vpop.f32.mrb[0].mxu0
  %v416 = vpop.f32.mrb[0].mxu0
  %v417 = vadd.f32 %v329, %v416
  %v418 = vpop.f32.mrb[0].mxu0
  %419 = vmatprep.mubr.bf16.mxu0 0
  %420 = vmatmul.mubr.bf16.gmra.mrb[0].mxu0 %v305
  %v421 = vpop.f32.mrb[0].mxu0
  %v422 = vadd.f32 %v329, %v421
  %v423 = vpop.f32.mrb[0].mxu0
  %v424 = vpop.f32.mrb[0].mxu0
  %v425 = vadd.f32 %v329, %v424
  %v426 = vpop.f32.mrb[0].mxu0
  %427 = vmatprep.mubr.bf16.mxu0 0
  %428 = vmatmul.mubr.bf16.gmra.mrb[0].mxu0 %v306
  %v429 = vpop.f32.mrb[0].mxu0
  %v430 = vadd.f32 %v329, %v429
  %v431 = vpop.f32.mrb[0].mxu0
  %v432 = vpop.f32.mrb[0].mxu0
  %v433 = vadd.f32 %v329, %v432
  %v434 = vpop.f32.mrb[0].mxu0
  %435 = vmatprep.mubr.bf16.mxu0 0
  %436 = vmatmul.mubr.bf16.gmra.mrb[0].mxu0 %v307
  %v437 = vpop.f32.mrb[0].mxu0
  %v438 = vadd.f32 %v329, %v437
  %v439 = vpop.f32.mrb[0].mxu0
  %v440 = vpop.f32.mrb[0].mxu0
  %v441 = vadd.f32 %v329, %v440
  %v442 = vpop.f32.mrb[0].mxu0
  %443 = vdwg.mxu0
  %vm444 = vcmask 130048
  %445 = vst.msk [vmem:[%s7] sm:$0xff] %vm444, %v414
  %446 = vst.msk [vmem:[%s7 + $0x8] sm:$0xff] %vm444, %v417
  %447 = vst.msk [vmem:[%s7 + $0x10] sm:$0xff] %vm444, %v422
  %448 = vst.msk [vmem:[%s7 + $0x18] sm:$0xff] %vm444, %v425
  %449 = vst.msk [vmem:[%s7 + $0x20] sm:$0xff] %vm444, %v430
  %450 = vst.msk [vmem:[%s7 + $0x28] sm:$0xff] %vm444, %v433
  %451 = vst.msk [vmem:[%s7 + $0x30] sm:$0xff] %vm444, %v438
  %452 = vst.msk [vmem:[%s7 + $0x38] sm:$0xff] %vm444, %v441
  // Predicated region
  $region30: #{resnet_mlp_forward.1} parent=0 // pred_check
    _
  $region31: #{resnet_mlp_forward.1} parent=0 // pred_check_branch
    %454 = sbr.rel (0) target = $region33
  $region32: #{resnet_mlp_forward.1} parent=0 // pred_region
    _
  $region33: #{resnet_mlp_forward.1} parent=0 // pred_fallthru
    _
  // Predicated region
  $region34: #{resnet_mlp_forward.1} parent=0 // pred_check
    _
  $region35: #{resnet_mlp_forward.1} parent=0 // pred_check_branch
    %456 = sbr.rel (0) target = $region37
  $region36: #{resnet_mlp_forward.1} parent=0 // pred_region
    _
  $region37: #{resnet_mlp_forward.1} parent=0 // pred_fallthru
    _

</llo_original>
